<compile_context>
chip_gen: v5e
topology: v5e:2x2
jax: 0.10.0
libtpu: 0.0.40
codegen_flags: <defaults>
</compile_context>

<pallas_src>
import math

import jax
import jax.numpy as jnp
from jax import lax
from jax.experimental import pallas as pl
from jax.experimental.pallas import tpu as pltpu


def _sub_noise_kernel(basis_ref, noise_ref, o_ref):
    # Compute (sub_basis @ noise)^T directly as a lane-dense (N, M) tile:
    # contract noise dim 0 (K) against basis dim 1 (K), result[n, m] =
    # sum_k noise[k, n] * basis[m, k].
    o_ref[...] = lax.dot_general(
        noise_ref[...],
        basis_ref[...],
        dimension_numbers=(((0,), (1,)), ((), ())),
        preferred_element_type=jnp.float32,
    ).astype(o_ref.dtype)


def sub_noise_forward(sub_basis: jax.Array, key: jax.Array, num_noises: int) -> jax.Array:
    """Reproduces SubNoise.forward().

    sub_basis: (size*size, n_sub) float32
    returns  : (num_noises, 3, size, size) float32
    """
    M, K = sub_basis.shape
    size = math.isqrt(M)
    N = 3 * num_noises

    # torch.randn equivalent (deterministic via key); glue, not hot path.
    noise = jax.random.normal(key, (K, N), dtype=sub_basis.dtype)

    # Single VMEM-resident block: no grid, full-extent specs. Output is the
    # already-transposed (N, M) matrix so stores are lane-dense (M = 256).
    out_t = pl.pallas_call(
        _sub_noise_kernel,
        out_shape=jax.ShapeDtypeStruct((N, M), sub_basis.dtype),
        in_specs=[
            pl.BlockSpec(memory_space=pltpu.MemorySpace.VMEM),  # sub_basis (M, K)
            pl.BlockSpec(memory_space=pltpu.MemorySpace.VMEM),  # noise     (K, N)
        ],
        out_specs=pl.BlockSpec(memory_space=pltpu.MemorySpace.VMEM),
    )(sub_basis, noise)

    # transpose(mm(sub_basis, noise), 0, 1).view(num_noises, 3, size, size)
    # out_t is already the transposed matrix -> pure metadata reshape.
    return out_t.reshape(num_noises, 3, size, size)


if __name__ == "__main__":
    key = jax.random.PRNGKey(0)
    k_basis, k_noise = jax.random.split(key)

    # Small shapes consistent with the module: size=16 -> sub_basis rows = 256,
    # subspace dimension n_sub = 32, num_noises = 2.
    size = 16
    n_sub = 32
    num_noises = 2

    # Deterministic "parameter" init for the subspace basis.
    sub_basis = jax.random.normal(k_basis, (size * size, n_sub), dtype=jnp.float32)

    out = sub_noise_forward(sub_basis, k_noise, num_noises)
    out = jax.block_until_ready(out)

    # Cross-check against a plain-JAX reference of the same computation
    # (same key -> same noise draw).
    noise_ref = jax.random.normal(k_noise, (n_sub, 3 * num_noises), dtype=jnp.float32)
    ref = (sub_basis @ noise_ref).T.reshape(num_noises, 3, size, size)
    assert out.shape == (num_noises, 3, size, size)
    assert jnp.allclose(out, ref, atol=1e-5, rtol=1e-5)

    print("KERNEL_OK")
</pallas_src>

<mosaic_0001>
module attributes {stable_mosaic.version = 11 : i64} {
  func.func @_sub_noise_kernel(%arg0: memref<256x32xf32, #tpu.memory_space<vmem>>, %arg1: memref<32x6xf32, #tpu.memory_space<vmem>>, %arg2: memref<6x256xf32, #tpu.memory_space<vmem>>) attributes {dimension_semantics = [], scalar_prefetch = 0 : i64, scratch_operands = 0 : i64, tpu.core_type = #tpu.core_type<tc>} {
    %c0 = arith.constant 0 : index
    %c0_0 = arith.constant 0 : index
    %0 = vector.load %arg1[%c0, %c0_0] : memref<32x6xf32, #tpu.memory_space<vmem>>, vector<32x6xf32>
    %c0_1 = arith.constant 0 : index
    %c0_2 = arith.constant 0 : index
    %1 = vector.load %arg0[%c0_1, %c0_2] : memref<256x32xf32, #tpu.memory_space<vmem>>, vector<256x32xf32>
    %cst = arith.constant dense<0.000000e+00> : vector<6x256xf32>
    %2 = tpu.matmul %0, %1, %cst {dimension_numbers = #tpu.dot_dimension_numbers<[0], [1], [1], [0], [0, 1, 1, 0], [], []>} : vector<32x6xf32>, vector<256x32xf32>, vector<6x256xf32> -> vector<6x256xf32>
    %c0_3 = arith.constant 0 : index
    %c0_4 = arith.constant 0 : index
    %3 = vector.load %arg2[%c0_3, %c0_4] : memref<6x256xf32, #tpu.memory_space<vmem>>, vector<6x256xf32>
    tpu.vector_store %arg2[%c0_3, %c0_4], %2 {strides = array<i32>} : memref<6x256xf32, #tpu.memory_space<vmem>>, vector<6x256xf32>,
    return
  }
}

</mosaic_0001>

<llo_original>
// kernel: tpu_custom_call.1
$region0: #{tpu_custom_call.1}
  #allocation0 [shape = 'u32[]', space=smem, size = 0x4, offset = 0x4, fixed_abs, tag = 'smem constant byte address 0x4 - core index']
  #allocation1 [shape = 'u32[72,128]{1,0:T(1,128)}', space=vmem, size = 0x9000, scoped, tag = 'internal scratch']
  %s0 = inlined_call_operand.vmem [shape: f32[256,32], index: 0, kind: input, shape index: {}]
  %s1 = inlined_call_operand.vmem [shape: f32[32,6], index: 1, kind: input, shape index: {}]
  %s2 = inlined_call_operand.hbm [shape: f32[6,256], index: 2, kind: output, shape index: {}]
  %s3 = sld [smem:[#allocation0]]
  $region18: #{tpu_custom_call.1} parent=0
    _
  %s5 = ssub.s32 1, %s3
  %s6 = scalar_select 0, %s5, %s3
  $region1: #{tpu_custom_call.1} parent=0
    #allocation2 [shape = 'u8[8192]{0}', space=vmem, size = 0x2000, scoped, tag = 'output window, operand 0, single buffered']
    #allocation3 [shape = 's32[1]{0}', space=sflag, size = 0x4, scoped, tag = 'scoped memory for tpu_custom_call.1']
    %7 = vsyncpa [#allocation3], 0
    // Predicated region
    $region2: #{tpu_custom_call.1} parent=1 // pred_check
      _
    $region3: #{tpu_custom_call.1} parent=1 // pred_check_branch
      %9 = sbr.rel (0) target = $region5
    $region4: #{tpu_custom_call.1} parent=1 // pred_region
      _
    $region5: #{tpu_custom_call.1} parent=1 // pred_fallthru
      _
    // Predicated region
    $region6: #{tpu_custom_call.1} parent=1 // pred_check
      _
    $region7: #{tpu_custom_call.1} parent=1 // pred_check_branch
      %11 = sbr.rel (0) target = $region9
    $region8: #{tpu_custom_call.1} parent=1 // pred_region
      _
    $region9: #{tpu_custom_call.1} parent=1 // pred_fallthru
      _
    %v12 = vld [vmem:[%s1] sm:$0xff]
    %v13 = vld [vmem:[%s1 + $0x8] sm:$0xff]
    %v14 = vld [vmem:[%s1 + $0x10] sm:$0xff]
    %v15 = vld [vmem:[%s1 + $0x18] sm:$0xff]
    %v16 = vld [vmem:[%s0] sm:$0xff]
    %v17 = vld [vmem:[%s0 + $0x8] sm:$0xff]
    %v18 = vld [vmem:[%s0 + $0x10] sm:$0xff]
    %v19 = vld [vmem:[%s0 + $0x18] sm:$0xff]
    %v20 = vld [vmem:[%s0 + $0x20] sm:$0xff]
    %v21 = vld [vmem:[%s0 + $0x28] sm:$0xff]
    %v22 = vld [vmem:[%s0 + $0x30] sm:$0xff]
    %v23 = vld [vmem:[%s0 + $0x38] sm:$0xff]
    %v24 = vld [vmem:[%s0 + $0x40] sm:$0xff]
    %v25 = vld [vmem:[%s0 + $0x48] sm:$0xff]
    %v26 = vld [vmem:[%s0 + $0x50] sm:$0xff]
    %v27 = vld [vmem:[%s0 + $0x58] sm:$0xff]
    %v28 = vld [vmem:[%s0 + $0x60] sm:$0xff]
    %v29 = vld [vmem:[%s0 + $0x68] sm:$0xff]
    %v30 = vld [vmem:[%s0 + $0x70] sm:$0xff]
    %v31 = vld [vmem:[%s0 + $0x78] sm:$0xff]
    %v32 = vld [vmem:[%s0 + $0x80] sm:$0xff]
    %v33 = vld [vmem:[%s0 + $0x88] sm:$0xff]
    %v34 = vld [vmem:[%s0 + $0x90] sm:$0xff]
    %v35 = vld [vmem:[%s0 + $0x98] sm:$0xff]
    %v36 = vld [vmem:[%s0 + $0xa0] sm:$0xff]
    %v37 = vld [vmem:[%s0 + $0xa8] sm:$0xff]
    %v38 = vld [vmem:[%s0 + $0xb0] sm:$0xff]
    %v39 = vld [vmem:[%s0 + $0xb8] sm:$0xff]
    %v40 = vld [vmem:[%s0 + $0xc0] sm:$0xff]
    %v41 = vld [vmem:[%s0 + $0xc8] sm:$0xff]
    %v42 = vld [vmem:[%s0 + $0xd0] sm:$0xff]
    %v43 = vld [vmem:[%s0 + $0xd8] sm:$0xff]
    %v44 = vld [vmem:[%s0 + $0xe0] sm:$0xff]
    %v45 = vld [vmem:[%s0 + $0xe8] sm:$0xff]
    %v46 = vld [vmem:[%s0 + $0xf0] sm:$0xff]
    %v47 = vld [vmem:[%s0 + $0xf8] sm:$0xff]
    %48 = vxpose.xlu0.b32.start [1/16] %v12, 128
    %49 = vxpose.xlu0.b32.cont [2/16] %v13, 128
    %50 = vxpose.xlu0.b32.cont [3/16] %v14, 128
    %51 = vxpose.xlu0.b32.cont [4/16] %v15, 128
    %52 = vxpose.xlu0.b32.cont [5/16] 0.0, 128
    %53 = vxpose.xlu0.b32.cont [6/16] 0.0, 128
    %54 = vxpose.xlu0.b32.cont [7/16] 0.0, 128
    %55 = vxpose.xlu0.b32.cont [8/16] 0.0, 128
    %56 = vxpose.xlu0.b32.cont [9/16] 0.0, 128
    %57 = vxpose.xlu0.b32.cont [10/16] 0.0, 128
    %58 = vxpose.xlu0.b32.cont [11/16] 0.0, 128
    %59 = vxpose.xlu0.b32.cont [12/16] 0.0, 128
    %60 = vxpose.xlu0.b32.cont [13/16] 0.0, 128
    %61 = vxpose.xlu0.b32.cont [14/16] 0.0, 128
    %62 = vxpose.xlu0.b32.cont [15/16] 0.0, 128
    %63 = vxpose.xlu0.b32.end [16/16] 0.0, 128
    %v64 = vpop.trf.xlu0
    %v65 = vpop.trf.xlu0
    %v66 = vpop.trf.xlu0
    %v67 = vpop.trf.xlu0
    %v68 = vpop.trf.xlu0
    %v69 = vpop.trf.xlu0
    %v70 = vpop.trf.xlu0
    %v71 = vpop.trf.xlu0
    %v72 = vpop.trf.xlu0
    %v73 = vpop.trf.xlu0
    %v74 = vpop.trf.xlu0
    %v75 = vpop.trf.xlu0
    %v76 = vpop.trf.xlu0
    %v77 = vpop.trf.xlu0
    %v78 = vpop.trf.xlu0
    %v79 = vpop.trf.xlu0
    %vm80 = vcmask 261120
    %v82 = vsel %vm80, %v64, 0
    %v85 = vsel %vm80, %v16, 0
    %v88 = vsel %vm80, %v17, 0
    %v91 = vsel %vm80, %v18, 0
    %v94 = vsel %vm80, %v19, 0
    %v97 = vsel %vm80, %v20, 0
    %v100 = vsel %vm80, %v21, 0
    %v103 = vsel %vm80, %v22, 0
    %v106 = vsel %vm80, %v23, 0
    %v109 = vsel %vm80, %v24, 0
    %v112 = vsel %vm80, %v25, 0
    %v115 = vsel %vm80, %v26, 0
    %v118 = vsel %vm80, %v27, 0
    %v121 = vsel %vm80, %v28, 0
    %v124 = vsel %vm80, %v29, 0
    %v127 = vsel %vm80, %v30, 0
    %v130 = vsel %vm80, %v31, 0
    %v133 = vsel %vm80, %v32, 0
    %v136 = vsel %vm80, %v33, 0
    %v139 = vsel %vm80, %v34, 0
    %v142 = vsel %vm80, %v35, 0
    %v145 = vsel %vm80, %v36, 0
    %v148 = vsel %vm80, %v37, 0
    %v151 = vsel %vm80, %v38, 0
    %v154 = vsel %vm80, %v39, 0
    %v157 = vsel %vm80, %v40, 0
    %v160 = vsel %vm80, %v41, 0
    %v163 = vsel %vm80, %v42, 0
    %v166 = vsel %vm80, %v43, 0
    %v169 = vsel %vm80, %v44, 0
    %v172 = vsel %vm80, %v45, 0
    %v175 = vsel %vm80, %v46, 0
    %v178 = vsel %vm80, %v47, 0
    %180 = vmatpush.xpose.msra.mxu0 %v130
    %181 = vmatpush.xpose.msra.mxu0 %v127
    %182 = vmatpush.xpose.msra.mxu0 %v124
    %183 = vmatpush.xpose.msra.mxu0 %v121
    %184 = vmatpush.xpose.msra.mxu0 %v118
    %185 = vmatpush.xpose.msra.mxu0 %v115
    %186 = vmatpush.xpose.msra.mxu0 %v112
    %187 = vmatpush.xpose.msra.mxu0 %v109
    %188 = vmatpush.xpose.msra.mxu0 %v106
    %189 = vmatpush.xpose.msra.mxu0 %v103
    %190 = vmatpush.xpose.msra.mxu0 %v100
    %191 = vmatpush.xpose.msra.mxu0 %v97
    %192 = vmatpush.xpose.msra.mxu0 %v94
    %193 = vmatpush.xpose.msra.mxu0 %v91
    %194 = vmatpush.xpose.msra.mxu0 %v88
    %195 = vmatpush.xpose.msra.mxu0 %v85
    %196 = vmatmul.f32.gmra.mxu0 %v82
    %v197 = vpop.f32.mrf.mxu0
    %v198 = vadd.f32 0.0, %v197
    %199 = vdwg.mxu0
    %200 = vmatpush.xpose.msra.mxu0 %v178
    %201 = vmatpush.xpose.msra.mxu0 %v175
    %202 = vmatpush.xpose.msra.mxu0 %v172
    %203 = vmatpush.xpose.msra.mxu0 %v169
    %204 = vmatpush.xpose.msra.mxu0 %v166
    %205 = vmatpush.xpose.msra.mxu0 %v163
    %206 = vmatpush.xpose.msra.mxu0 %v160
    %207 = vmatpush.xpose.msra.mxu0 %v157
    %208 = vmatpush.xpose.msra.mxu0 %v154
    %209 = vmatpush.xpose.msra.mxu0 %v151
    %210 = vmatpush.xpose.msra.mxu0 %v148
    %211 = vmatpush.xpose.msra.mxu0 %v145
    %212 = vmatpush.xpose.msra.mxu0 %v142
    %213 = vmatpush.xpose.msra.mxu0 %v139
    %214 = vmatpush.xpose.msra.mxu0 %v136
    %215 = vmatpush.xpose.msra.mxu0 %v133
    %216 = vmatmul.f32.gmra.mxu0 %v82
    %v217 = vpop.f32.mrf.mxu0
    %v218 = vadd.f32 0.0, %v217
    %219 = vdwg.mxu0
    %220 = vst [vmem:[#allocation2] sm:$0x3f] %v198
    %221 = vst [vmem:[#allocation2 + $0x8] sm:$0x3f] %v218
    // Predicated region
    $region10: #{tpu_custom_call.1} parent=1 // pred_check
      _
    $region11: #{tpu_custom_call.1} parent=1 // pred_check_branch
      %223 = sbr.rel (0) target = $region13
    $region12: #{tpu_custom_call.1} parent=1 // pred_region
      %225 = vsyncadd [#allocation3], 0
      %s227 = sshll.u32 [#allocation2], 4
      %s228 = int_to_ptr.vmem [resolvable:$true] %s227
      %s229 = sshll.u32 %s2, 4
      %s230 = int_to_ptr.hbm [resolvable:$true] %s229
      %232 = dma.vmem_to_hbm [thread:$0]  %s228, 256, %s230, [#allocation3]
    $region13: #{tpu_custom_call.1} parent=1 // pred_fallthru
      _
    // Predicated region
    $region14: #{tpu_custom_call.1} parent=1 // pred_check
      _
    $region15: #{tpu_custom_call.1} parent=1 // pred_check_branch
      %234 = sbr.rel (0) target = $region17
    $region16: #{tpu_custom_call.1} parent=1 // pred_region
      %236 = dma.done [#allocation3], 256
    $region17: #{tpu_custom_call.1} parent=1 // pred_fallthru
      _
    %237 = vsyncpa [#allocation3], 1

</llo_original>
